<compile_context>
chip_gen: v7x
topology: tpu7x:2x2x1
jax: 0.10.0
libtpu: 0.0.40
codegen_flags: <defaults>
</compile_context>

<pallas_src>
import functools

import jax
import jax.numpy as jnp
from jax.experimental import pallas as pl
from jax.experimental.pallas import tpu as pltpu


HIDDEN = 32


def _policy_kernel(x_ref, w1_ref, b1_ref, w2_ref, b2_ref, wh_ref, bh_ref,
                   pat_ref, out_ref, *, num_actions):
    """Feature-major body.  x_ref: (in, T) ; out_ref: (A+2, T)."""
    mat_dtype = w1_ref.dtype

    x = x_ref[...]                                               # (in, T)

    # Torso: Linear -> ReLU -> Linear -> ReLU (bf16 MXU operands, f32 accum).
    h1 = jnp.dot(w1_ref[...], x, preferred_element_type=jnp.float32) + b1_ref[...]
    h1 = jnp.maximum(h1, 0.0).astype(mat_dtype)                  # (32, T)
    h2 = jnp.dot(w2_ref[...], h1, preferred_element_type=jnp.float32) + b2_ref[...]
    h2 = jnp.maximum(h2, 0.0).astype(mat_dtype)                  # (32, T)

    # Fused policy+value(+pad) head: one (A+2, 32) @ (32, T) matmul.
    # Rows 0..A-1 = logits, row A = value, row A+1 = 0 (pad).
    head = jnp.dot(wh_ref[...], h2, preferred_element_type=jnp.float32) + bh_ref[...]

    # Stable logsumexp over the action rows (sublane reduce; lanes stay dense).
    logits = head[:num_actions, :]
    m = jnp.max(logits, axis=0, keepdims=True)
    lse = m + jnp.log(jnp.sum(jnp.exp(logits - m), axis=0, keepdims=True))  # (1, T)

    # Single dense store: pattern = e_{A+1}, so row A+1 becomes lse and all
    # other rows (raw logits, value) pass through unchanged.
    out_ref[...] = head + lse * pat_ref[...]


def _vmem_budget_bytes():
    try:
        cap = int(getattr(pltpu.get_tpu_info(), "vmem_capacity_bytes", 64 << 20))
    except Exception:
        cap = 64 << 20          # conservative default: v7x has 64 MiB per TC
    return cap * 3 // 4          # ~48 MiB on v7x, ~96 MiB on v5e/v6e


def _choose_tile_b(B, in_size, A, x_itemsize, budget_bytes):
    if B <= 128:
        return B, B              # single full block (dims equal full array dims)
    # Double-buffered streamed bytes per batch column (x in + packed slab out).
    per_col = 2 * in_size * x_itemsize + 2 * (A + 2) * 4
    t = (budget_bytes // 2) // max(per_col, 1)        # leave half as headroom
    t = min(t, 8192)
    t = min(t, max(128, ((B // 2) // 128) * 128))     # keep >= 2 grid steps (v7x)
    t = max(128, (t // 128) * 128)                    # lane-aligned tile
    b_pad = pl.cdiv(B, t) * t
    return t, b_pad


def categorical_mlp_policy_forward(x, kparams):
    """x: (B, input_size) float32.  Returns (logits, log_probs, values)."""
    B, in_size = x.shape
    A = kparams["Wh"].shape[0] - 2
    out_rows = A + 2
    mat_dtype = kparams["W1"].dtype
    x_itemsize = jnp.dtype(mat_dtype).itemsize

    budget = _vmem_budget_bytes()
    tile_b, b_pad = _choose_tile_b(B, in_size, A, x_itemsize, budget)

    # Wrapper-side layout plumbing: feature-major x, padded to a whole number
    # of tiles (padded columns are zeros -> finite logits, no NaNs).
    x_t = x.T.astype(mat_dtype)
    if b_pad != B:
        x_t = jnp.pad(x_t, ((0, 0), (0, b_pad - B)))

    grid = (b_pad // tile_b,)

    def resident(shape):
        # Weights / biases: constant index map -> stay resident in VMEM.
        return pl.BlockSpec(shape, lambda i: (0, 0))

    in_specs = [
        pl.BlockSpec((in_size, tile_b), lambda i: (0, i)),      # x, streamed
        resident((HIDDEN, in_size)), resident((HIDDEN, 1)),     # W1, b1
        resident((HIDDEN, HIDDEN)), resident((HIDDEN, 1)),      # W2, b2
        resident((out_rows, HIDDEN)), resident((out_rows, 1)),  # fused head W, b
        resident((out_rows, 1)),                                # lse pattern
    ]
    out_spec = pl.BlockSpec((out_rows, tile_b), lambda i: (0, i))

    flops = 2 * b_pad * (in_size * HIDDEN + HIDDEN * HIDDEN + HIDDEN * out_rows)
    w_bytes = sum(int(v.size) * v.dtype.itemsize for v in kparams.values())
    bytes_accessed = (b_pad * in_size * x_itemsize + b_pad * out_rows * 4 + w_bytes)

    out = pl.pallas_call(
        functools.partial(_policy_kernel, num_actions=A),
        out_shape=jax.ShapeDtypeStruct((out_rows, b_pad), jnp.float32),
        grid=grid,
        in_specs=in_specs,
        out_specs=out_spec,
        compiler_params=pltpu.CompilerParams(
            dimension_semantics=("parallel",),   # megacore-shardable on v7x
            vmem_limit_bytes=budget,             # per-generation VMEM budget
        ),
        cost_estimate=pl.CostEstimate(
            flops=flops,
            transcendentals=b_pad * (A + 1),     # A exps + 1 log per column
            bytes_accessed=bytes_accessed,
        ),
    )(x_t, kparams["W1"], kparams["b1"], kparams["W2"], kparams["b2"],
      kparams["Wh"], kparams["bh"], kparams["pattern"])

    out = out[:, :B]
    logits = out[:A, :].T                 # (B, A) raw logits (no recomposition)
    values = out[A:A + 1, :].T            # (B, 1)
    lse = out[A + 1:A + 2, :].T           # (B, 1)
    log_probs = logits - lse              # == Categorical(logits=...).logits
    return logits, log_probs, values


def init_params(key, input_size, output_size):
    """PyTorch-style Linear init U(-1/sqrt(fan_in), +); weights stored (out, in)."""
    def linear(key, fan_in, fan_out):
        kw, kb = jax.random.split(key)
        bound = 1.0 / jnp.sqrt(float(fan_in))
        W = jax.random.uniform(kw, (fan_out, fan_in), jnp.float32, -bound, bound)
        b = jax.random.uniform(kb, (fan_out,), jnp.float32, -bound, bound)
        return W, b

    k1, k2, k3, k4 = jax.random.split(key, 4)
    W1, b1 = linear(k1, input_size, HIDDEN)
    W2, b2 = linear(k2, HIDDEN, HIDDEN)
    Wp, bp = linear(k3, HIDDEN, output_size)
    Wv, bv = linear(k4, HIDDEN, 1)
    return dict(W1=W1, b1=b1, W2=W2, b2=b2, Wp=Wp, bp=bp, Wv=Wv, bv=bv)


def prepare_params(params, matmul_dtype=jnp.bfloat16):
    """One-time param prep: fuse heads (+ zero pad row for the lse slot),
    reshape biases to (out, 1), and cast matmul weights to the MXU dtype."""
    A = params["Wp"].shape[0]
    wh = jnp.concatenate(
        [params["Wp"], params["Wv"], jnp.zeros((1, HIDDEN), jnp.float32)], axis=0)
    bh = jnp.concatenate(
        [params["bp"], params["bv"], jnp.zeros((1,), jnp.float32)], axis=0)
    pattern = jnp.zeros((A + 2, 1), jnp.float32).at[A + 1, 0].set(1.0)
    return dict(
        W1=params["W1"].astype(matmul_dtype), b1=params["b1"].reshape(HIDDEN, 1),
        W2=params["W2"].astype(matmul_dtype), b2=params["b2"].reshape(HIDDEN, 1),
        Wh=wh.astype(matmul_dtype), bh=bh.reshape(A + 2, 1),
        pattern=pattern)


def reference_forward(x, params, matmul_dtype=jnp.bfloat16):
    """Pure-JAX reference mirroring the kernel numerics (bf16 operands, f32 accum)."""
    md = matmul_dtype
    xb = x.astype(md)
    h1 = jnp.dot(xb, params["W1"].astype(md).T,
                 preferred_element_type=jnp.float32) + params["b1"]
    h1 = jnp.maximum(h1, 0.0).astype(md)
    h2 = jnp.dot(h1, params["W2"].astype(md).T,
                 preferred_element_type=jnp.float32) + params["b2"]
    h2 = jnp.maximum(h2, 0.0).astype(md)
    logits = jnp.dot(h2, params["Wp"].astype(md).T,
                     preferred_element_type=jnp.float32) + params["bp"]
    values = jnp.dot(h2, params["Wv"].astype(md).T,
                     preferred_element_type=jnp.float32) + params["bv"]
    log_probs = logits - jax.nn.logsumexp(logits, axis=-1, keepdims=True)
    return logits, log_probs, values


if __name__ == "__main__":
    key = jax.random.PRNGKey(0)
    k_param, k_x = jax.random.split(key)

    # Small demo shapes typical of tabular-MDP RL; batch grid has 2 parallel steps.
    batch, input_size, output_size = 256, 16, 8
    params = init_params(k_param, input_size, output_size)
    kparams = prepare_params(params)              # one-time fuse / cast / layout
    x = jax.random.normal(k_x, (batch, input_size), jnp.float32)

    fwd = jax.jit(categorical_mlp_policy_forward)
    logits, log_probs, values = fwd(x, kparams)
    jax.block_until_ready((logits, log_probs, values))

    ref_logits, ref_logp, ref_values = reference_forward(x, params)
    assert logits.shape == (batch, output_size)
    assert log_probs.shape == (batch, output_size)
    assert values.shape == (batch, 1)
    assert jnp.allclose(logits, ref_logits, atol=2e-3, rtol=2e-3)
    assert jnp.allclose(log_probs, ref_logp, atol=2e-3, rtol=2e-3)
    assert jnp.allclose(values, ref_values, atol=2e-3, rtol=2e-3)

    # TODO(synk): torch.distributions.Categorical object construction has no
    # Pallas equivalent; the kernel returns raw logits plus normalized
    # log-probs (Categorical(logits=...).logits) and the value head output.
    print("KERNEL_OK")
</pallas_src>

<mosaic_0001>
module attributes {stable_mosaic.version = 11 : i64} {
  func.func @_policy_kernel(%arg0: i32, %arg1: memref<16x128xbf16, #tpu.memory_space<vmem>>, %arg2: memref<32x16xbf16, #tpu.memory_space<vmem>>, %arg3: memref<32x1xf32, #tpu.memory_space<vmem>>, %arg4: memref<32x32xbf16, #tpu.memory_space<vmem>>, %arg5: memref<32x1xf32, #tpu.memory_space<vmem>>, %arg6: memref<10x32xbf16, #tpu.memory_space<vmem>>, %arg7: memref<10x1xf32, #tpu.memory_space<vmem>>, %arg8: memref<10x1xf32, #tpu.memory_space<vmem>>, %arg9: memref<10x128xf32, #tpu.memory_space<vmem>>) attributes {dimension_semantics = [#tpu.dimension_semantics<parallel>], iteration_bounds = array<i64: 2>, scalar_prefetch = 0 : i64, scratch_operands = 0 : i64, tpu.core_type = #tpu.core_type<tc>, window_params = [{transform_indices = @transform_0, window_bounds = array<i64: 16, 128>}, {pipeline_mode = #tpu.pipeline_mode<synchronous>, transform_indices = @transform_1, window_bounds = array<i64: 32, 16>}, {pipeline_mode = #tpu.pipeline_mode<synchronous>, transform_indices = @transform_2, window_bounds = array<i64: 32, 1>}, {pipeline_mode = #tpu.pipeline_mode<synchronous>, transform_indices = @transform_3, window_bounds = array<i64: 32, 32>}, {pipeline_mode = #tpu.pipeline_mode<synchronous>, transform_indices = @transform_4, window_bounds = array<i64: 32, 1>}, {pipeline_mode = #tpu.pipeline_mode<synchronous>, transform_indices = @transform_5, window_bounds = array<i64: 10, 32>}, {pipeline_mode = #tpu.pipeline_mode<synchronous>, transform_indices = @transform_6, window_bounds = array<i64: 10, 1>}, {pipeline_mode = #tpu.pipeline_mode<synchronous>, transform_indices = @transform_7, window_bounds = array<i64: 10, 1>}, {transform_indices = @transform_8, window_bounds = array<i64: 10, 128>}]} {
    %c0 = arith.constant 0 : index
    %c0_0 = arith.constant 0 : index
    %0 = vector.load %arg1[%c0, %c0_0] : memref<16x128xbf16, #tpu.memory_space<vmem>>, vector<16x128xbf16>
    %c0_1 = arith.constant 0 : index
    %c0_2 = arith.constant 0 : index
    %1 = vector.load %arg2[%c0_1, %c0_2] : memref<32x16xbf16, #tpu.memory_space<vmem>>, vector<32x16xbf16>
    %cst = arith.constant dense<0.000000e+00> : vector<32x128xf32>
    %2 = tpu.matmul %1, %0, %cst {dimension_numbers = #tpu.dot_dimension_numbers<[1], [0], [0], [1], [0, 0, 1, 1], [], []>} : vector<32x16xbf16>, vector<16x128xbf16>, vector<32x128xf32> -> vector<32x128xf32>
    %c0_3 = arith.constant 0 : index
    %c0_4 = arith.constant 0 : index
    %3 = vector.load %arg3[%c0_3, %c0_4] : memref<32x1xf32, #tpu.memory_space<vmem>>, vector<32x1xf32>
    %4 = vector.broadcast %3 : vector<32x1xf32> to vector<32x128xf32>
    %5 = arith.addf %2, %4 : vector<32x128xf32>
    %cst_5 = arith.constant 0.000000e+00 : f32
    %6 = vector.broadcast %cst_5 : f32 to vector<32x128xf32>
    %7 = arith.maximumf %5, %6 : vector<32x128xf32>
    %8 = arith.truncf %7 : vector<32x128xf32> to vector<32x128xbf16>
    %c0_6 = arith.constant 0 : index
    %c0_7 = arith.constant 0 : index
    %9 = vector.load %arg4[%c0_6, %c0_7] : memref<32x32xbf16, #tpu.memory_space<vmem>>, vector<32x32xbf16>
    %cst_8 = arith.constant dense<0.000000e+00> : vector<32x128xf32>
    %10 = tpu.matmul %9, %8, %cst_8 {dimension_numbers = #tpu.dot_dimension_numbers<[1], [0], [0], [1], [0, 0, 1, 1], [], []>} : vector<32x32xbf16>, vector<32x128xbf16>, vector<32x128xf32> -> vector<32x128xf32>
    %c0_9 = arith.constant 0 : index
    %c0_10 = arith.constant 0 : index
    %11 = vector.load %arg5[%c0_9, %c0_10] : memref<32x1xf32, #tpu.memory_space<vmem>>, vector<32x1xf32>
    %12 = vector.broadcast %11 : vector<32x1xf32> to vector<32x128xf32>
    %13 = arith.addf %10, %12 : vector<32x128xf32>
    %cst_11 = arith.constant 0.000000e+00 : f32
    %14 = vector.broadcast %cst_11 : f32 to vector<32x128xf32>
    %15 = arith.maximumf %13, %14 : vector<32x128xf32>
    %16 = arith.truncf %15 : vector<32x128xf32> to vector<32x128xbf16>
    %c0_12 = arith.constant 0 : index
    %c0_13 = arith.constant 0 : index
    %17 = vector.load %arg6[%c0_12, %c0_13] : memref<10x32xbf16, #tpu.memory_space<vmem>>, vector<10x32xbf16>
    %cst_14 = arith.constant dense<0.000000e+00> : vector<10x128xf32>
    %18 = tpu.matmul %17, %16, %cst_14 {dimension_numbers = #tpu.dot_dimension_numbers<[1], [0], [0], [1], [0, 0, 1, 1], [], []>} : vector<10x32xbf16>, vector<32x128xbf16>, vector<10x128xf32> -> vector<10x128xf32>
    %c0_15 = arith.constant 0 : index
    %c0_16 = arith.constant 0 : index
    %19 = vector.load %arg7[%c0_15, %c0_16] : memref<10x1xf32, #tpu.memory_space<vmem>>, vector<10x1xf32>
    %20 = vector.broadcast %19 : vector<10x1xf32> to vector<10x128xf32>
    %21 = arith.addf %18, %20 : vector<10x128xf32>
    %22 = vector.extract_strided_slice %21 {offsets = [0, 0], sizes = [8, 128], strides = [1, 1]} : vector<10x128xf32> to vector<8x128xf32>
    %cst_17 = arith.constant dense<0xFF800000> : vector<128xf32>
    %23 = vector.multi_reduction <maximumf>, %22, %cst_17 [0] : vector<8x128xf32> to vector<128xf32>
    %24 = vector.shape_cast %23 : vector<128xf32> to vector<1x128xf32>
    %25 = vector.broadcast %24 : vector<1x128xf32> to vector<8x128xf32>
    %26 = arith.subf %22, %25 : vector<8x128xf32>
    %27 = math.exp %26 : vector<8x128xf32>
    %cst_18 = arith.constant dense<0.000000e+00> : vector<128xf32>
    %28 = vector.multi_reduction <add>, %27, %cst_18 [0] : vector<8x128xf32> to vector<128xf32>
    %29 = vector.shape_cast %28 : vector<128xf32> to vector<1x128xf32>
    %30 = math.log %29 : vector<1x128xf32>
    %31 = arith.addf %24, %30 : vector<1x128xf32>
    %c0_19 = arith.constant 0 : index
    %c0_20 = arith.constant 0 : index
    %32 = vector.load %arg8[%c0_19, %c0_20] : memref<10x1xf32, #tpu.memory_space<vmem>>, vector<10x1xf32>
    %33 = vector.broadcast %31 : vector<1x128xf32> to vector<10x128xf32>
    %34 = vector.broadcast %32 : vector<10x1xf32> to vector<10x128xf32>
    %35 = arith.mulf %33, %34 : vector<10x128xf32>
    %36 = arith.addf %21, %35 : vector<10x128xf32>
    %c0_21 = arith.constant 0 : index
    %c0_22 = arith.constant 0 : index
    %37 = vector.load %arg9[%c0_21, %c0_22] : memref<10x128xf32, #tpu.memory_space<vmem>>, vector<10x128xf32>
    tpu.vector_store %arg9[%c0_21, %c0_22], %36 {strides = array<i32>} : memref<10x128xf32, #tpu.memory_space<vmem>>, vector<10x128xf32>,
    return
  }
  func.func @transform_0(%arg0: i32) -> (i32, i32) {
    %c0_i32 = arith.constant 0 : i32
    %c0_i32_0 = arith.constant 0 : i32
    return %c0_i32, %arg0 : i32, i32
  }
  func.func @transform_1(%arg0: i32) -> (i32, i32) {
    %c0_i32 = arith.constant 0 : i32
    %c0_i32_0 = arith.constant 0 : i32
    %c0_i32_1 = arith.constant 0 : i32
    return %c0_i32, %c0_i32_0 : i32, i32
  }
  func.func @transform_2(%arg0: i32) -> (i32, i32) {
    %c0_i32 = arith.constant 0 : i32
    %c0_i32_0 = arith.constant 0 : i32
    %c0_i32_1 = arith.constant 0 : i32
    return %c0_i32, %c0_i32_0 : i32, i32
  }
  func.func @transform_3(%arg0: i32) -> (i32, i32) {
    %c0_i32 = arith.constant 0 : i32
    %c0_i32_0 = arith.constant 0 : i32
    %c0_i32_1 = arith.constant 0 : i32
    return %c0_i32, %c0_i32_0 : i32, i32
  }
  func.func @transform_4(%arg0: i32) -> (i32, i32) {
    %c0_i32 = arith.constant 0 : i32
    %c0_i32_0 = arith.constant 0 : i32
    %c0_i32_1 = arith.constant 0 : i32
    return %c0_i32, %c0_i32_0 : i32, i32
  }
  func.func @transform_5(%arg0: i32) -> (i32, i32) {
    %c0_i32 = arith.constant 0 : i32
    %c0_i32_0 = arith.constant 0 : i32
    %c0_i32_1 = arith.constant 0 : i32
    return %c0_i32, %c0_i32_0 : i32, i32
  }
  func.func @transform_6(%arg0: i32) -> (i32, i32) {
    %c0_i32 = arith.constant 0 : i32
    %c0_i32_0 = arith.constant 0 : i32
    %c0_i32_1 = arith.constant 0 : i32
    return %c0_i32, %c0_i32_0 : i32, i32
  }
  func.func @transform_7(%arg0: i32) -> (i32, i32) {
    %c0_i32 = arith.constant 0 : i32
    %c0_i32_0 = arith.constant 0 : i32
    %c0_i32_1 = arith.constant 0 : i32
    return %c0_i32, %c0_i32_0 : i32, i32
  }
  func.func @transform_8(%arg0: i32) -> (i32, i32) {
    %c0_i32 = arith.constant 0 : i32
    %c0_i32_0 = arith.constant 0 : i32
    return %c0_i32, %arg0 : i32, i32
  }
}

</mosaic_0001>

<llo_original>
// kernel: categorical_mlp_policy_forward.1
$region0: #{categorical_mlp_policy_forward.1}
  #allocation0 [shape = 'u32[]', space=smem, size = 0x4, offset = 0x4, fixed_abs, tag = 'smem constant byte address 0x4 - core index']
  #allocation1 [shape = 'u32[144,128]{1,0:T(1,128)}', space=vmem, size = 0x12000, scoped, tag = 'internal scratch']
  %s0 = inlined_call_operand.vmem [shape: bf16[16,256], index: 0, kind: input, shape index: {}]
  %s1 = inlined_call_operand.vmem [shape: bf16[32,16], index: 1, kind: input, shape index: {}]
  %s2 = inlined_call_operand.vmem [shape: f32[32,1], index: 2, kind: input, shape index: {}]
  %s3 = inlined_call_operand.vmem [shape: bf16[32,32], index: 3, kind: input, shape index: {}]
  %s4 = inlined_call_operand.vmem [shape: f32[32,1], index: 4, kind: input, shape index: {}]
  %s5 = inlined_call_operand.vmem [shape: bf16[10,32], index: 5, kind: input, shape index: {}]
  %s6 = inlined_call_operand.vmem [shape: f32[10,1], index: 6, kind: input, shape index: {}]
  %s7 = inlined_call_operand.vmem [shape: f32[10,1], index: 7, kind: input, shape index: {}]
  %s8 = inlined_call_operand.vmem [shape: f32[10,256], index: 8, kind: output, shape index: {}]
  %s9 = sld [smem:[#allocation0]]
  $region140: #{categorical_mlp_policy_forward.1} parent=0
    _
  %s11 = ssub.s32 1, %s9
  %s12 = scalar_select 0, %s11, %s9
  $region1: #{categorical_mlp_policy_forward.1} parent=0
    #allocation2 [shape = 'u8[8192]{0}', space=vmem, size = 0x2000, scoped, tag = 'input window, operand 0']
    #allocation3 [shape = 'u8[16384]{0}', space=vmem, size = 0x4000, scoped, tag = 'output window, operand 0']
    loop: start=0, step=1, limit=4
    $region2: #{categorical_mlp_policy_forward.1} parent=1 // loop_pre_header
      _
    $region3: #{categorical_mlp_policy_forward.1} parent=1 // loop_header
      %s14 = sphi 0, %s18
      %p15 = scmp.ge.s32.totalorder %s14, 4
      %s24 = sphi 0, %s26
      %s27 = sphi 0, %s24
      %s28 = sphi 0, %s27
      %s44 = sphi 0, %s28
      %s48 = sphi 0, %s48
      %s50 = sphi 0, %s48
      %s51 = sphi 0, %s50
      %s65 = sphi 0, %s51
      %s69 = sphi 0, %s69
      %s71 = sphi 0, %s69
      %s72 = sphi 0, %s71
      %s86 = sphi 0, %s72
      %s90 = sphi 0, %s90
      %s92 = sphi 0, %s90
      %s93 = sphi 0, %s92
      %s107 = sphi 0, %s93
      %s111 = sphi 0, %s111
      %s113 = sphi 0, %s111
      %s114 = sphi 0, %s113
      %s128 = sphi 0, %s114
      %s132 = sphi 0, %s132
      %s134 = sphi 0, %s132
      %s135 = sphi 0, %s134
      %s149 = sphi 0, %s135
      %s153 = sphi 0, %s153
      %s155 = sphi 0, %s153
      %s156 = sphi 0, %s155
      %s170 = sphi 0, %s156
      %s174 = sphi 0, %s174
      %s176 = sphi 0, %s174
      %s177 = sphi 0, %s176
      %s191 = sphi 0, %s177
      %s197 = sphi 0, %s199
      %s200 = sphi 0, %s197
      %s201 = sphi 0, %s200
      %s217 = sphi 0, %s201
    $region4: #{categorical_mlp_policy_forward.1} parent=1 // loop_header_branch
      %17 = sbr.rel (%p15) target = $region8
    $region5: #{categorical_mlp_policy_forward.1} parent=1 // loop_body
      %s19 = ssub.s32 %s14, 1
      %s20 = ssub.s32 %s14, 2
      %s21 = sadd.s32 %s14, 1
      %s22 = ssub.s32 %s14, %s21
      %p23 = scmp.eq.s32.totalorder %s22, 0
      %s25 = sadd.s32 %s24, 1
      %s26 = scalar_select %p23, %s24, %s25
      %p29 = pneg %p23
      %p30 = scmp.eq.s32.totalorder %s14, 1
      %p31 = por %p29, %p30
      %p32 = scmp.ne.s32.totalorder %s24, %s27
      %p33 = scmp.eq.s32.totalorder %s14, 0
      %p34 = por %p32, %p33
      %p35 = scmp.ne.s32.totalorder %s24, %s27
      %p36 = scmp.eq.s32.totalorder %s19, 1
      %p37 = por %p35, %p36
      %p38 = scmp.ne.s32.totalorder %s27, %s28
      %p39 = scmp.eq.s32.totalorder %s19, 0
      %p40 = por %p38, %p39
      %p41 = scmp.ne.s32.totalorder %s27, %s28
      %p42 = scmp.eq.s32.totalorder %s20, 1
      %p43 = por %p41, %p42
      %p45 = scmp.ne.s32.totalorder %s28, %s44
      %p46 = scmp.eq.s32.totalorder %s20, 0
      %p47 = por %p45, %p46
      %s49 = sadd.s32 %s48, 1
      %p52 = scmp.eq.s32.totalorder %s14, 1
      %p53 = scmp.ne.s32.totalorder %s48, %s50
      %p54 = scmp.eq.s32.totalorder %s14, 0
      %p55 = por %p53, %p54
      %p56 = scmp.ne.s32.totalorder %s48, %s50
      %p57 = scmp.eq.s32.totalorder %s19, 1
      %p58 = por %p56, %p57
      %p59 = scmp.ne.s32.totalorder %s50, %s51
      %p60 = scmp.eq.s32.totalorder %s19, 0
      %p61 = por %p59, %p60
      %p62 = scmp.ne.s32.totalorder %s50, %s51
      %p63 = scmp.eq.s32.totalorder %s20, 1
      %p64 = por %p62, %p63
      %p66 = scmp.ne.s32.totalorder %s51, %s65
      %p67 = scmp.eq.s32.totalorder %s20, 0
      %p68 = por %p66, %p67
      %s70 = sadd.s32 %s69, 1
      %p73 = scmp.eq.s32.totalorder %s14, 1
      %p74 = scmp.ne.s32.totalorder %s69, %s71
      %p75 = scmp.eq.s32.totalorder %s14, 0
      %p76 = por %p74, %p75
      %p77 = scmp.ne.s32.totalorder %s69, %s71
      %p78 = scmp.eq.s32.totalorder %s19, 1
      %p79 = por %p77, %p78
      %p80 = scmp.ne.s32.totalorder %s71, %s72
      %p81 = scmp.eq.s32.totalorder %s19, 0
      %p82 = por %p80, %p81
      %p83 = scmp.ne.s32.totalorder %s71, %s72
      %p84 = scmp.eq.s32.totalorder %s20, 1
      %p85 = por %p83, %p84
      %p87 = scmp.ne.s32.totalorder %s72, %s86
      %p88 = scmp.eq.s32.totalorder %s20, 0
      %p89 = por %p87, %p88
      %s91 = sadd.s32 %s90, 1
      %p94 = scmp.eq.s32.totalorder %s14, 1
      %p95 = scmp.ne.s32.totalorder %s90, %s92
      %p96 = scmp.eq.s32.totalorder %s14, 0
      %p97 = por %p95, %p96
      %p98 = scmp.ne.s32.totalorder %s90, %s92
      %p99 = scmp.eq.s32.totalorder %s19, 1
      %p100 = por %p98, %p99
      %p101 = scmp.ne.s32.totalorder %s92, %s93
      %p102 = scmp.eq.s32.totalorder %s19, 0
      %p103 = por %p101, %p102
      %p104 = scmp.ne.s32.totalorder %s92, %s93
      %p105 = scmp.eq.s32.totalorder %s20, 1
      %p106 = por %p104, %p105
      %p108 = scmp.ne.s32.totalorder %s93, %s107
      %p109 = scmp.eq.s32.totalorder %s20, 0
      %p110 = por %p108, %p109
      %s112 = sadd.s32 %s111, 1
      %p115 = scmp.eq.s32.totalorder %s14, 1
      %p116 = scmp.ne.s32.totalorder %s111, %s113
      %p117 = scmp.eq.s32.totalorder %s14, 0
      %p118 = por %p116, %p117
      %p119 = scmp.ne.s32.totalorder %s111, %s113
      %p120 = scmp.eq.s32.totalorder %s19, 1
      %p121 = por %p119, %p120
      %p122 = scmp.ne.s32.totalorder %s113, %s114
      %p123 = scmp.eq.s32.totalorder %s19, 0
      %p124 = por %p122, %p123
      %p125 = scmp.ne.s32.totalorder %s113, %s114
      %p126 = scmp.eq.s32.totalorder %s20, 1
      %p127 = por %p125, %p126
      %p129 = scmp.ne.s32.totalorder %s114, %s128
      %p130 = scmp.eq.s32.totalorder %s20, 0
      %p131 = por %p129, %p130
      %s133 = sadd.s32 %s132, 1
      %p136 = scmp.eq.s32.totalorder %s14, 1
      %p137 = scmp.ne.s32.totalorder %s132, %s134
      %p138 = scmp.eq.s32.totalorder %s14, 0
      %p139 = por %p137, %p138
      %p140 = scmp.ne.s32.totalorder %s132, %s134
      %p141 = scmp.eq.s32.totalorder %s19, 1
      %p142 = por %p140, %p141
      %p143 = scmp.ne.s32.totalorder %s134, %s135
      %p144 = scmp.eq.s32.totalorder %s19, 0
      %p145 = por %p143, %p144
      %p146 = scmp.ne.s32.totalorder %s134, %s135
      %p147 = scmp.eq.s32.totalorder %s20, 1
      %p148 = por %p146, %p147
      %p150 = scmp.ne.s32.totalorder %s135, %s149
      %p151 = scmp.eq.s32.totalorder %s20, 0
      %p152 = por %p150, %p151
      %s154 = sadd.s32 %s153, 1
      %p157 = scmp.eq.s32.totalorder %s14, 1
      %p158 = scmp.ne.s32.totalorder %s153, %s155
      %p159 = scmp.eq.s32.totalorder %s14, 0
      %p160 = por %p158, %p159
      %p161 = scmp.ne.s32.totalorder %s153, %s155
      %p162 = scmp.eq.s32.totalorder %s19, 1
      %p163 = por %p161, %p162
      %p164 = scmp.ne.s32.totalorder %s155, %s156
      %p165 = scmp.eq.s32.totalorder %s19, 0
      %p166 = por %p164, %p165
      %p167 = scmp.ne.s32.totalorder %s155, %s156
      %p168 = scmp.eq.s32.totalorder %s20, 1
      %p169 = por %p167, %p168
      %p171 = scmp.ne.s32.totalorder %s156, %s170
      %p172 = scmp.eq.s32.totalorder %s20, 0
      %p173 = por %p171, %p172
      %s175 = sadd.s32 %s174, 1
      %p178 = scmp.eq.s32.totalorder %s14, 1
      %p179 = scmp.ne.s32.totalorder %s174, %s176
      %p180 = scmp.eq.s32.totalorder %s14, 0
      %p181 = por %p179, %p180
      %p182 = scmp.ne.s32.totalorder %s174, %s176
      %p183 = scmp.eq.s32.totalorder %s19, 1
      %p184 = por %p182, %p183
      %p185 = scmp.ne.s32.totalorder %s176, %s177
      %p186 = scmp.eq.s32.totalorder %s19, 0
      %p187 = por %p185, %p186
      %p188 = scmp.ne.s32.totalorder %s176, %s177
      %p189 = scmp.eq.s32.totalorder %s20, 1
      %p190 = por %p188, %p189
      %p192 = scmp.ne.s32.totalorder %s177, %s191
      %p193 = scmp.eq.s32.totalorder %s20, 0
      %p194 = por %p192, %p193
      %s195 = ssub.s32 %s14, %s21
      %p196 = scmp.eq.s32.totalorder %s195, 0
      %s198 = sadd.s32 %s197, 1
      %s199 = scalar_select %p196, %s197, %s198
      %p202 = pneg %p196
      %p203 = scmp.eq.s32.totalorder %s14, 1
      %p204 = por %p202, %p203
      %p205 = scmp.ne.s32.totalorder %s197, %s200
      %p206 = scmp.eq.s32.totalorder %s14, 0
      %p207 = por %p205, %p206
      %p208 = scmp.ne.s32.totalorder %s197, %s200
      %p209 = scmp.eq.s32.totalorder %s19, 1
      %p210 = por %p208, %p209
      %p211 = scmp.ne.s32.totalorder %s200, %s201
      %p212 = scmp.eq.s32.totalorder %s19, 0
      %p213 = por %p211, %p212
      %p214 = scmp.ne.s32.totalorder %s200, %s201
      %p215 = scmp.eq.s32.totalorder %s20, 1
      %p216 = por %p214, %p215
      %p218 = scmp.ne.s32.totalorder %s201, %s217
      %p219 = scmp.eq.s32.totalorder %s20, 0
      %p220 = por %p218, %p219
      %p221 = scmp.le.s32.totalorder 1, %s14
      %p222 = scmp.lt.s32.totalorder %s14, 3
      %p223 = pnand %p221, %p222
      %p224 = pneg %p223
      // Predicated region
      $region9: #{categorical_mlp_policy_forward.1} parent=5 // pred_check
        _
      $region10: #{categorical_mlp_policy_forward.1} parent=5 // pred_check_branch
        %226 = sbr.rel (%p223) target = $region12
      $region11: #{categorical_mlp_policy_forward.1} parent=5 // pred_region
        %s227 = ssub.s32 %s14, 1
        // Predicated region
        $region13: #{categorical_mlp_policy_forward.1} parent=11 // pred_check
          %p228 = pneg %p61
        $region14: #{categorical_mlp_policy_forward.1} parent=11 // pred_check_branch
          %230 = sbr.rel (%p228) target = $region16
        $region15: #{categorical_mlp_policy_forward.1} parent=11 // pred_region
          _
        $region16: #{categorical_mlp_policy_forward.1} parent=11 // pred_fallthru
          _
        // Predicated region
        $region17: #{categorical_mlp_policy_forward.1} parent=11 // pred_check
          %p231 = pneg %p82
        $region18: #{categorical_mlp_policy_forward.1} parent=11 // pred_check_branch
          %233 = sbr.rel (%p231) target = $region20
        $region19: #{categorical_mlp_policy_forward.1} parent=11 // pred_region
          _
        $region20: #{categorical_mlp_policy_forward.1} parent=11 // pred_fallthru
          _
        // Predicated region
        $region21: #{categorical_mlp_policy_forward.1} parent=11 // pred_check
          %p234 = pneg %p103
        $region22: #{categorical_mlp_policy_forward.1} parent=11 // pred_check_branch
          %236 = sbr.rel (%p234) target = $region24
        $region23: #{categorical_mlp_policy_forward.1} parent=11 // pred_region
          _
        $region24: #{categorical_mlp_policy_forward.1} parent=11 // pred_fallthru
          _
        // Predicated region
        $region25: #{categorical_mlp_policy_forward.1} parent=11 // pred_check
          %p237 = pneg %p124
        $region26: #{categorical_mlp_policy_forward.1} parent=11 // pred_check_branch
          %239 = sbr.rel (%p237) target = $region28
        $region27: #{categorical_mlp_policy_forward.1} parent=11 // pred_region
          _
        $region28: #{categorical_mlp_policy_forward.1} parent=11 // pred_fallthru
          _
        // Predicated region
        $region29: #{categorical_mlp_policy_forward.1} parent=11 // pred_check
          %p240 = pneg %p145
        $region30: #{categorical_mlp_policy_forward.1} parent=11 // pred_check_branch
          %242 = sbr.rel (%p240) target = $region32
        $region31: #{categorical_mlp_policy_forward.1} parent=11 // pred_region
          _
        $region32: #{categorical_mlp_policy_forward.1} parent=11 // pred_fallthru
          _
        // Predicated region
        $region33: #{categorical_mlp_policy_forward.1} parent=11 // pred_check
          %p243 = pneg %p166
        $region34: #{categorical_mlp_policy_forward.1} parent=11 // pred_check_branch
          %245 = sbr.rel (%p243) target = $region36
        $region35: #{categorical_mlp_policy_forward.1} parent=11 // pred_region
          _
        $region36: #{categorical_mlp_policy_forward.1} parent=11 // pred_fallthru
          _
        // Predicated region
        $region37: #{categorical_mlp_policy_forward.1} parent=11 // pred_check
          %p246 = pneg %p187
        $region38: #{categorical_mlp_policy_forward.1} parent=11 // pred_check_branch
          %248 = sbr.rel (%p246) target = $region40
        $region39: #{categorical_mlp_policy_forward.1} parent=11 // pred_region
          _
        $region40: #{categorical_mlp_policy_forward.1} parent=11 // pred_fallthru
          _
      $region12: #{categorical_mlp_policy_forward.1} parent=5 // pred_fallthru
        _
      %p249 = scmp.lt.s32.totalorder %s14, 2
      // Predicated region
      $region41: #{categorical_mlp_policy_forward.1} parent=5 // pred_check
        %p250 = pneg %p249
      $region42: #{categorical_mlp_policy_forward.1} parent=5 // pred_check_branch
        %252 = sbr.rel (%p250) target = $region44
      $region43: #{categorical_mlp_policy_forward.1} parent=5 // pred_region
        // Predicated region
        $region45: #{categorical_mlp_policy_forward.1} parent=43 // pred_check
          %p253 = pneg %p34
        $region46: #{categorical_mlp_policy_forward.1} parent=43 // pred_check_branch
          %255 = sbr.rel (%p253) target = $region48
        $region47: #{categorical_mlp_policy_forward.1} parent=43 // pred_region
          %s256 = sand.u32 %s24, 1
          %s257 = sand.u32 %s24, 1
          %s258 = smul.addr %s257, 8
          %s259 = scalar_lea.vmem [#allocation2], %s258
          %s260 = smul.addr %s14, 4
          %s261 = scalar_lea.vmem %s0, %s260
          // Predicated region
          $region49: #{categorical_mlp_policy_forward.1} parent=47 // pred_check
            _
          $region50: #{categorical_mlp_policy_forward.1} parent=47 // pred_check_branch
            %263 = sbr.rel (0) target = $region52
          $region51: #{categorical_mlp_policy_forward.1} parent=47 // pred_region
            // Predicated region
            $region53: #{categorical_mlp_policy_forward.1} parent=51 // pred_check
              _
            $region54: #{categorical_mlp_policy_forward.1} parent=51 // pred_check_branch
              %265 = sbr.rel target = $region56
            $region55: #{categorical_mlp_policy_forward.1} parent=51 // pred_region
              // Predicated region
              $region68: #{categorical_mlp_policy_forward.1} parent=55 // pred_check
                _
              $region69: #{categorical_mlp_policy_forward.1} parent=55 // pred_check_branch
                %282 = sbr.rel (0) target = $region71
              $region70: #{categorical_mlp_policy_forward.1} parent=55 // pred_region
                loop: start=0, step=1, limit=1
                $region72: #{categorical_mlp_policy_forward.1} parent=70 // loop_pre_header
                  _
                $region73: #{categorical_mlp_policy_forward.1} parent=70 // loop_header
                  %s284 = sphi 0, %s288
                  %p285 = scmp.ge.s32.totalorder %s284, 1
                  %s289 = sphi %s261, %s261
                  %s290 = sphi %s259, %s259
                $region74: #{categorical_mlp_policy_forward.1} parent=70 // loop_header_branch
                  %287 = sbr.rel (%p285) target = $region78
                $region75: #{categorical_mlp_policy_forward.1} parent=70 // loop_body
                  _
                $region76: #{categorical_mlp_policy_forward.1} parent=70 // loop_footer
                  %s288 = sadd.s32 1, %s284
                $region77: #{categorical_mlp_policy_forward.1} parent=70 // loop_footer_branch
                  %283 = sbr.rel target = $region73
                $region78: #{categorical_mlp_policy_forward.1} parent=70 // loop_exit
                  _
                loop: start=0, step=1, limit=1
                $region79: #{categorical_mlp_policy_forward.1} parent=70 // loop_pre_header
                  _
                $region80: #{categorical_mlp_policy_forward.1} parent=70 // loop_header
                  %s293 = sphi 0, %s297
                  %p294 = scmp.ge.s32.totalorder %s293, 1
                  %s298 = sphi %s261, %s261
                  %s299 = sphi %s259, %s259
                $region81: #{categorical_mlp_policy_forward.1} parent=70 // loop_header_branch
                  %296 = sbr.rel (%p294) target = $region85
                $region82: #{categorical_mlp_policy_forward.1} parent=70 // loop_body
                  %v300 = vld [vmem:[%s298] sm:$0xf]
                  %301 = vst [vmem:[%s299] sm:$0xf] %v300
                  %v302 = vld [vmem:[%s298 + $0x8] sm:$0xf]
                  %303 = vst [vmem:[%s299 + $0x4] sm:$0xf] %v302
                $region83: #{categorical_mlp_policy_forward.1} parent=70 // loop_footer
                  %s297 = sadd.s32 1, %s293
                $region84: #{categorical_mlp_policy_forward.1} parent=70 // loop_footer_branch
                  %292 = sbr.rel target = $region80
                $region85: #{categorical_mlp_policy_forward.1} parent=70 // loop_exit
                  _
              $region71: #{categorical_mlp_policy_forward.1} parent=55 // pred_fallthru
                _
            $region56: #{categorical_mlp_policy_forward.1} parent=51 // pred_fallthru
              _
            // Predicated region
            $region57: #{categorical_mlp_policy_forward.1} parent=51 // pred_check
              _
            $region58: #{categorical_mlp_policy_forward.1} parent=51 // pred_check_branch
              %267 = sbr.rel (0) target = $region60
            $region59: #{categorical_mlp_policy_forward.1} parent=51 // pred_region
              loop: start=0, step=1, limit=1
              $region61: #{categorical_mlp_policy_forward.1} parent=59 // loop_pre_header
                _
              $region62: #{categorical_mlp_policy_forward.1} parent=59 // loop_header
                %s270 = sphi 0, %s274
                %p271 = scmp.ge.s32.totalorder %s270, 1
                %s275 = sphi %s261, %s261
                %s276 = sphi %s259, %s259
              $region63: #{categorical_mlp_policy_forward.1} parent=59 // loop_header_branch
                %273 = sbr.rel (%p271) target = $region67
              $region64: #{categorical_mlp_policy_forward.1} parent=59 // loop_body
                %v277 = vld [vmem:[%s275] sm:$0xf]
                %278 = vst [vmem:[%s276] sm:$0xf] %v277
                %v279 = vld [vmem:[%s275 + $0x8] sm:$0xf]
                %280 = vst [vmem:[%s276 + $0x4] sm:$0xf] %v279
              $region65: #{categorical_mlp_policy_forward.1} parent=59 // loop_footer
                %s274 = sadd.s32 1, %s270
              $region66: #{categorical_mlp_policy_forward.1} parent=59 // loop_footer_branch
                %269 = sbr.rel target = $region62
              $region67: #{categorical_mlp_policy_forward.1} parent=59 // loop_exit
                _
            $region60: #{categorical_mlp_policy_forward.1} parent=51 // pred_fallthru
              _
          $region52: #{categorical_mlp_policy_forward.1} parent=47 // pred_fallthru
            _
          %304 = vnop
        $region48: #{categorical_mlp_policy_forward.1} parent=43 // pred_fallthru
          _
      $region44: #{categorical_mlp_policy_forward.1} parent=5 // pred_fallthru
        _
      %p305 = scmp.le.s32.totalorder 1, %s14
      %p306 = scmp.lt.s32.totalorder %s14, 3
      %p307 = pnand %p305, %p306
      %p308 = pneg %p307
      // Predicated region
      $region86: #{categorical_mlp_policy_forward.1} parent=5 // pred_check
        _
      $region87: #{categorical_mlp_policy_forward.1} parent=5 // pred_check_branch
        %310 = sbr.rel (%p307) target = $region89
      $region88: #{categorical_mlp_policy_forward.1} parent=5 // pred_region
        %s311 = ssub.s32 %s14, 1
        %s312 = sand.u32 %s27, 1
        %s313 = sand.u32 %s27, 1
        %s314 = smul.addr %s313, 8
        %s315 = scalar_lea.vmem [#allocation2], %s314
        // Predicated region
        $region90: #{categorical_mlp_policy_forward.1} parent=88 // pred_check
          %p316 = pneg %p40
        $region91: #{categorical_mlp_policy_forward.1} parent=88 // pred_check_branch
          %318 = sbr.rel (%p316) target = $region93
        $region92: #{categorical_mlp_policy_forward.1} parent=88 // pred_region
          _
        $region93: #{categorical_mlp_policy_forward.1} parent=88 // pred_fallthru
          _
        %s319 = sand.u32 %s27, 1
        %s320 = sand.u32 %s27, 1
        %s321 = smul.addr %s320, 8
        %s322 = scalar_lea.vmem [#allocation2], %s321
        %p323 = pneg %p40
        %p324 = pneg %p37
        %p325 = pneg %p61
        %p326 = pneg %p58
        %p327 = pneg %p82
        %p328 = pneg %p79
        %p329 = pneg %p103
        %p330 = pneg %p100
        %p331 = pneg %p124
        %p332 = pneg %p121
        %p333 = pneg %p145
        %p334 = pneg %p142
        %p335 = pneg %p166
        %p336 = pneg %p163
        %p337 = pneg %p187
        %p338 = pneg %p184
        %p339 = pneg %p213
        %p340 = pneg %p210
        %s341 = sand.u32 %s200, 1
        %s342 = sand.u32 %s200, 1
        %s343 = smul.addr %s342, 16
        %s344 = scalar_lea.vmem [#allocation3], %s343
        %v346 = vld [vmem:[%s315] sm:$0xf]
        %v347 = vld [vmem:[%s315 + $0x4] sm:$0xf]
        %v348 = vld [vmem:[%s1] sm:$0xf]
        %v349 = vld [vmem:[%s1 + $0x4] sm:$0xf]
        %v350 = vld [vmem:[%s1 + $0x8] sm:$0xf]
        %v351 = vld [vmem:[%s1 + $0xc] sm:$0xf]
        %v352 = vld [vmem:[%s2] sm:$0xff]
        %v353 = vld [vmem:[%s2 + $0x8] sm:$0xff]
        %v354 = vld [vmem:[%s2 + $0x10] sm:$0xff]
        %v355 = vld [vmem:[%s2 + $0x18] sm:$0xff]
        %357 = vset.pattern.permute.xlu0 0
        %358 = vperm.xlu0 %357, %v352
        %v359 = vpop.permute.xlu0 %358
        %362 = vset.pattern.permute.xlu0 0
        %363 = vperm.xlu0 %362, %v353
        %v364 = vpop.permute.xlu0 %363
        %367 = vset.pattern.permute.xlu0 0
        %368 = vperm.xlu0 %367, %v354
        %v369 = vpop.permute.xlu0 %368
        %372 = vset.pattern.permute.xlu0 0
        %373 = vperm.xlu0 %372, %v355
        %v374 = vpop.permute.xlu0 %373
        %v380 = vunpack.c.l.b16 %v348
        %v381 = vunpack.c.l.b16 %v349
        %v382 = vunpack.c.l.b16 %v350
        %v383 = vunpack.c.l.b16 %v351
        %v384 = vpack.c.b16 %v381, %v380
        %v385 = vpack.c.b16 %v383, %v382
        %v388 = vunpack.c.l.b16 %v346
        %v389 = vunpack.c.l.b16 %v347
        %v390 = vpack.c.b16 %v389, %v388
        %vm392 = vcmask 130048
        %v394 = vsel %vm392, %v384, 0
        %v397 = vsel %vm392, %v385, 0
        %399 = vmatprep.subr.bf16.mxu0 0
        %400 = vmatpush1.bf16.msra.mxu0 %v390
        %401 = vmatprep.subr.bf16.mxu0 0
        %402 = vmatpush1.bf16.msra.mxu0 0
        %403 = vmatprep.subr.bf16.mxu0 0
        %404 = vmatpush1.bf16.msra.mxu0 0
        %405 = vmatprep.subr.bf16.mxu0 0
        %406 = vmatpush1.bf16.msra.mxu0 0
        %407 = vmatprep.subr.bf16.mxu0 0
        %408 = vmatpush1.bf16.msra.mxu0 0
        %409 = vmatprep.subr.bf16.mxu0 0
        %410 = vmatpush1.bf16.msra.mxu0 0
        %411 = vmatprep.subr.bf16.mxu0 0
        %412 = vmatpush1.bf16.msra.mxu0 0
        %413 = vmatprep.subr.bf16.mxu0 0
        %414 = vmatpush1.bf16.msra.mxu0 0
        %415 = vmatprep.subr.bf16.mxu0 0
        %416 = vmatpush1.bf16.msra.mxu0 0
        %417 = vmatprep.subr.bf16.mxu0 0
        %418 = vmatpush1.bf16.msra.mxu0 0
        %419 = vmatprep.subr.bf16.mxu0 0
        %420 = vmatpush1.bf16.msra.mxu0 0
        %421 = vmatprep.subr.bf16.mxu0 0
        %422 = vmatpush1.bf16.msra.mxu0 0
        %423 = vmatprep.subr.bf16.mxu0 0
        %424 = vmatpush1.bf16.msra.mxu0 0
        %425 = vmatprep.subr.bf16.mxu0 0
        %426 = vmatpush1.bf16.msra.mxu0 0
        %427 = vmatprep.subr.bf16.mxu0 0
        %428 = vmatpush1.bf16.msra.mxu0 0
        %429 = vmatprep.subr.bf16.mxu0 0
        %430 = vmatpush1.bf16.msra.mxu0 0
        %431 = vmatprep.mubr.bf16.mxu0 0
        %432 = vmatmul.mubr.bf16.gmra.mrb[0].mxu0 %v394
        %v433 = vpop.f32.mrb[0].mxu0
        %v434 = vadd.f32 %v359, %v433
        %v435 = vpop.f32.mrb[0].mxu0
        %v436 = vpop.f32.mrb[0].mxu0
        %v437 = vadd.f32 %v364, %v436
        %v438 = vpop.f32.mrb[0].mxu0
        %439 = vmatprep.mubr.bf16.mxu0 0
        %440 = vmatmul.mubr.bf16.gmra.mrb[0].mxu0 %v397
        %v441 = vpop.f32.mrb[0].mxu0
        %v442 = vadd.f32 %v369, %v441
        %v443 = vpop.f32.mrb[0].mxu0
        %v444 = vpop.f32.mrb[0].mxu0
        %v445 = vadd.f32 %v374, %v444
        %v446 = vpop.f32.mrb[0].mxu0
        %447 = vdwg.mxu0
        %v448 = vmax.f32 %v434, 0.0
        %v449 = vmax.f32 %v437, 0.0
        %v450 = vmax.f32 %v442, 0.0
        %v451 = vmax.f32 %v445, 0.0
        %v452 = vpack.c.bf16 %v449, %v448
        %v453 = vpack.c.bf16 %v451, %v450
        %v454 = vld [vmem:[%s3] sm:$0xf]
        %v455 = vld [vmem:[%s3 + $0x4] sm:$0xf]
        %v456 = vld [vmem:[%s3 + $0x8] sm:$0xf]
        %v457 = vld [vmem:[%s3 + $0xc] sm:$0xf]
        %v458 = vld [vmem:[%s4] sm:$0xff]
        %v459 = vld [vmem:[%s4 + $0x8] sm:$0xff]
        %v460 = vld [vmem:[%s4 + $0x10] sm:$0xff]
        %v461 = vld [vmem:[%s4 + $0x18] sm:$0xff]
        %463 = vset.pattern.permute.xlu0 0
        %464 = vperm.xlu0 %463, %v458
        %v465 = vpop.permute.xlu0 %464
        %468 = vset.pattern.permute.xlu0 0
        %469 = vperm.xlu0 %468, %v459
        %v470 = vpop.permute.xlu0 %469
        %473 = vset.pattern.permute.xlu0 0
        %474 = vperm.xlu0 %473, %v460
        %v475 = vpop.permute.xlu0 %474
        %478 = vset.pattern.permute.xlu0 0
        %479 = vperm.xlu0 %478, %v461
        %v480 = vpop.permute.xlu0 %479
        %v486 = vunpack.c.l.b16 %v454
        %v487 = vunpack.c.l.b16 %v455
        %v488 = vunpack.c.l.b16 %v456
        %v489 = vunpack.c.l.b16 %v457
        %v490 = vpack.c.b16 %v487, %v486
        %v491 = vpack.c.b16 %v489, %v488
        %vm492 = vcmask 261120
        %v494 = vsel %vm492, %v490, 0
        %v497 = vsel %vm492, %v491, 0
        %499 = vmatprep.subr.bf16.mxu0 0
        %500 = vmatpush1.bf16.msra.mxu0 %v452
        %501 = vmatprep.subr.bf16.mxu0 0
        %502 = vmatpush1.bf16.msra.mxu0 %v453
        %503 = vmatprep.subr.bf16.mxu0 0
        %504 = vmatpush1.bf16.msra.mxu0 0
        %505 = vmatprep.subr.bf16.mxu0 0
        %506 = vmatpush1.bf16.msra.mxu0 0
        %507 = vmatprep.subr.bf16.mxu0 0
        %508 = vmatpush1.bf16.msra.mxu0 0
        %509 = vmatprep.subr.bf16.mxu0 0
        %510 = vmatpush1.bf16.msra.mxu0 0
        %511 = vmatprep.subr.bf16.mxu0 0
        %512 = vmatpush1.bf16.msra.mxu0 0
        %513 = vmatprep.subr.bf16.mxu0 0
        %514 = vmatpush1.bf16.msra.mxu0 0
        %515 = vmatprep.subr.bf16.mxu0 0
        %516 = vmatpush1.bf16.msra.mxu0 0
        %517 = vmatprep.subr.bf16.mxu0 0
        %518 = vmatpush1.bf16.msra.mxu0 0
        %519 = vmatprep.subr.bf16.mxu0 0
        %520 = vmatpush1.bf16.msra.mxu0 0
        %521 = vmatprep.subr.bf16.mxu0 0
        %522 = vmatpush1.bf16.msra.mxu0 0
        %523 = vmatprep.subr.bf16.mxu0 0
        %524 = vmatpush1.bf16.msra.mxu0 0
        %525 = vmatprep.subr.bf16.mxu0 0
        %526 = vmatpush1.bf16.msra.mxu0 0
        %527 = vmatprep.subr.bf16.mxu0 0
        %528 = vmatpush1.bf16.msra.mxu0 0
        %529 = vmatprep.subr.bf16.mxu0 0
        %530 = vmatpush1.bf16.msra.mxu0 0
        %531 = vmatprep.mubr.bf16.mxu0 0
        %532 = vmatmul.mubr.bf16.gmra.mrb[0].mxu0 %v494
        %v533 = vpop.f32.mrb[0].mxu0
        %v534 = vadd.f32 %v465, %v533
        %v535 = vpop.f32.mrb[0].mxu0
        %v536 = vpop.f32.mrb[0].mxu0
        %v537 = vadd.f32 %v470, %v536
        %v538 = vpop.f32.mrb[0].mxu0
        %539 = vmatprep.mubr.bf16.mxu0 0
        %540 = vmatmul.mubr.bf16.gmra.mrb[0].mxu0 %v497
        %v541 = vpop.f32.mrb[0].mxu0
        %v542 = vadd.f32 %v475, %v541
        %v543 = vpop.f32.mrb[0].mxu0
        %v544 = vpop.f32.mrb[0].mxu0
        %v545 = vadd.f32 %v480, %v544
        %v546 = vpop.f32.mrb[0].mxu0
        %547 = vdwg.mxu0
        %v548 = vmax.f32 %v534, 0.0
        %v549 = vmax.f32 %v537, 0.0
        %v550 = vmax.f32 %v542, 0.0
        %v551 = vmax.f32 %v545, 0.0
        %v552 = vpack.c.bf16 %v549, %v548
        %v553 = vpack.c.bf16 %v551, %v550
        %v554 = vld [vmem:[%s5] sm:$0xf]
        %v555 = vld [vmem:[%s5 + $0x4] sm:$0x1]
        %v556 = vld [vmem:[%s6] sm:$0xff]
        %v557 = vld [vmem:[%s6 + $0x8] sm:$0x3]
        %559 = vset.pattern.permute.xlu0 0
        %560 = vperm.xlu0 %559, %v556
        %v561 = vpop.permute.xlu0 %560
        %564 = vset.pattern.permute.xlu0 0
        %565 = vperm.xlu0 %564, %v557
        %v566 = vpop.permute.xlu0 %565
        %v570 = vunpack.c.l.b16 %v554
        %v571 = vunpack.c.l.b16 %v555
        %v572 = vpack.c.b16 %v571, %v570
        %v574 = vsel %vm492, %v572, 0
        %576 = vmatprep.subr.bf16.mxu0 0
        %577 = vmatpush1.bf16.msra.mxu0 %v552
        %578 = vmatprep.subr.bf16.mxu0 0
        %579 = vmatpush1.bf16.msra.mxu0 %v553
        %580 = vmatprep.subr.bf16.mxu0 0
        %581 = vmatpush1.bf16.msra.mxu0 0
        %582 = vmatprep.subr.bf16.mxu0 0
        %583 = vmatpush1.bf16.msra.mxu0 0
        %584 = vmatprep.subr.bf16.mxu0 0
        %585 = vmatpush1.bf16.msra.mxu0 0
        %586 = vmatprep.subr.bf16.mxu0 0
        %587 = vmatpush1.bf16.msra.mxu0 0
        %588 = vmatprep.subr.bf16.mxu0 0
        %589 = vmatpush1.bf16.msra.mxu0 0
        %590 = vmatprep.subr.bf16.mxu0 0
        %591 = vmatpush1.bf16.msra.mxu0 0
        %592 = vmatprep.subr.bf16.mxu0 0
        %593 = vmatpush1.bf16.msra.mxu0 0
        %594 = vmatprep.subr.bf16.mxu0 0
        %595 = vmatpush1.bf16.msra.mxu0 0
        %596 = vmatprep.subr.bf16.mxu0 0
        %597 = vmatpush1.bf16.msra.mxu0 0
        %598 = vmatprep.subr.bf16.mxu0 0
        %599 = vmatpush1.bf16.msra.mxu0 0
        %600 = vmatprep.subr.bf16.mxu0 0
        %601 = vmatpush1.bf16.msra.mxu0 0
        %602 = vmatprep.subr.bf16.mxu0 0
        %603 = vmatpush1.bf16.msra.mxu0 0
        %604 = vmatprep.subr.bf16.mxu0 0
        %605 = vmatpush1.bf16.msra.mxu0 0
        %606 = vmatprep.subr.bf16.mxu0 0
        %607 = vmatpush1.bf16.msra.mxu0 0
        %608 = vmatprep.mubr.bf16.mxu0 0
        %609 = vmatmul.mubr.bf16.gmra.mrb[0].mxu0 %v574
        %v610 = vpop.f32.mrb[0].mxu0
        %v611 = vadd.f32 %v561, %v610
        %v612 = vpop.f32.mrb[0].mxu0
        %v613 = vpop.f32.mrb[0].mxu0
        %v614 = vadd.f32 %v566, %v613
        %v615 = vpop.f32.mrb[0].mxu0
        %616 = vdwg.mxu0
        %v617 = vrot.slane %v611, 4
        %v618 = vmax.f32 %v611, %v617
        %v619 = vrot.slane %v618, 2
        %v620 = vmax.f32 %v618, %v619
        %v621 = vrot.slane %v620, 1
        %v622 = vmax.f32 %v620, %v621
        %v623 = vsub.f32 %v611, %v622
        %v624 = vmul.f32 %v623, 1.442695
        %v625 = vpow.pop %v624
        %v626 = vrot.slane %v625, 4
        %v627 = vadd.f32 %v625, %v626
        %v628 = vrot.slane %v627, 2
        %v629 = vadd.f32 %v627, %v628
        %v630 = vrot.slane %v629, 1
        %v631 = vadd.f32 %v629, %v630
        %v632 = vlog2.pop %v631
        %v633 = vmul.f32 %v632, 0.6931472
        %v634 = vadd.f32 %v622, %v633
        %v635 = vld [vmem:[%s7] sm:$0xff]
        %v636 = vld [vmem:[%s7 + $0x8] sm:$0x3]
        %638 = vset.pattern.permute.xlu0 0
        %639 = vperm.xlu0 %638, %v635
        %v640 = vpop.permute.xlu0 %639
        %643 = vset.pattern.permute.xlu0 0
        %644 = vperm.xlu0 %643, %v636
        %v645 = vpop.permute.xlu0 %644
        %v647 = vmul.f32 %v634, %v640
        %v648 = vmul.f32 %v634, %v645
        %v649 = vadd.f32 %v611, %v647
        %v650 = vadd.f32 %v614, %v648
        %651 = vst [vmem:[%s344] sm:$0xff] %v649
        %652 = vst [vmem:[%s344 + $0x8] sm:$0x3] %v650
        %s653 = sand.u32 %s200, 1
        %s654 = sand.u32 %s200, 1
        %s655 = smul.addr %s654, 16
        %s656 = scalar_lea.vmem [#allocation3], %s655
        // Predicated region
        $region94: #{categorical_mlp_policy_forward.1} parent=88 // pred_check
          %p657 = pneg %p210
        $region95: #{categorical_mlp_policy_forward.1} parent=88 // pred_check_branch
          %659 = sbr.rel (%p657) target = $region97
        $region96: #{categorical_mlp_policy_forward.1} parent=88 // pred_region
          %s660 = smul.addr %s19, 8
          %s661 = scalar_lea.vmem %s8, %s660
          // Predicated region
          $region98: #{categorical_mlp_policy_forward.1} parent=96 // pred_check
            _
          $region99: #{categorical_mlp_policy_forward.1} parent=96 // pred_check_branch
            %663 = sbr.rel (0) target = $region101
          $region100: #{categorical_mlp_policy_forward.1} parent=96 // pred_region
            // Predicated region
            $region102: #{categorical_mlp_policy_forward.1} parent=100 // pred_check
              _
            $region103: #{categorical_mlp_policy_forward.1} parent=100 // pred_check_branch
              %665 = sbr.rel (0) target = $region105
            $region104: #{categorical_mlp_policy_forward.1} parent=100 // pred_region
              // Predicated region
              $region117: #{categorical_mlp_policy_forward.1} parent=104 // pred_check
                _
              $region118: #{categorical_mlp_policy_forward.1} parent=104 // pred_check_branch
                %682 = sbr.rel (0) target = $region120
              $region119: #{categorical_mlp_policy_forward.1} parent=104 // pred_region
                loop: start=0, step=1, limit=1
                $region121: #{categorical_mlp_policy_forward.1} parent=119 // loop_pre_header
                  _
                $region122: #{categorical_mlp_policy_forward.1} parent=119 // loop_header
                  %s684 = sphi 0, %s688
                  %p685 = scmp.ge.s32.totalorder %s684, 1
                  %s689 = sphi %s656, %s656
                  %s690 = sphi %s661, %s661
                $region123: #{categorical_mlp_policy_forward.1} parent=119 // loop_header_branch
                  %687 = sbr.rel (%p685) target = $region127
                $region124: #{categorical_mlp_policy_forward.1} parent=119 // loop_body
                  %v691 = vld [vmem:[%s689] sm:$0xff]
                  %692 = vst [vmem:[%s690] sm:$0xff] %v691
                  %v693 = vld [vmem:[%s689 + $0x8] sm:$0xff]
                  %694 = vst [vmem:[%s690 + $0x10] sm:$0xff] %v693
                $region125: #{categorical_mlp_policy_forward.1} parent=119 // loop_footer
                  %s688 = sadd.s32 1, %s684
                $region126: #{categorical_mlp_policy_forward.1} parent=119 // loop_footer_branch
                  %683 = sbr.rel target = $region122
                $region127: #{categorical_mlp_policy_forward.1} parent=119 // loop_exit
                  _
              $region120: #{categorical_mlp_policy_forward.1} parent=104 // pred_fallthru
                _
              // Predicated region
              $region128: #{categorical_mlp_policy_forward.1} parent=104 // pred_check
                _
              $region129: #{categorical_mlp_policy_forward.1} parent=104 // pred_check_branch
                %696 = sbr.rel target = $region131
              $region130: #{categorical_mlp_policy_forward.1} parent=104 // pred_region
                _
              $region131: #{categorical_mlp_policy_forward.1} parent=104 // pred_fallthru
                _
            $region105: #{categorical_mlp_policy_forward.1} parent=100 // pred_fallthru
              _
            // Predicated region
            $region106: #{categorical_mlp_policy_forward.1} parent=100 // pred_check
              _
            $region107: #{categorical_mlp_policy_forward.1} parent=100 // pred_check_branch
              %667 = sbr.rel target = $region109
            $region108: #{categorical_mlp_policy_forward.1} parent=100 // pred_region
              loop: start=0, step=1, limit=1
              $region110: #{categorical_mlp_policy_forward.1} parent=108 // loop_pre_header
                _
              $region111: #{categorical_mlp_policy_forward.1} parent=108 // loop_header
                %s670 = sphi 0, %s674
                %p671 = scmp.ge.s32.totalorder %s670, 1
                %s675 = sphi %s656, %s656
                %s676 = sphi %s661, %s661
              $region112: #{categorical_mlp_policy_forward.1} parent=108 // loop_header_branch
                %673 = sbr.rel (%p671) target = $region116
              $region113: #{categorical_mlp_policy_forward.1} parent=108 // loop_body
                %v677 = vld [vmem:[%s675] sm:$0xff]
                %678 = vst [vmem:[%s676] sm:$0xff] %v677
                %v679 = vld [vmem:[%s675 + $0x8] sm:$0xff]
                %680 = vst [vmem:[%s676 + $0x10] sm:$0xff] %v679
              $region114: #{categorical_mlp_policy_forward.1} parent=108 // loop_footer
                %s674 = sadd.s32 1, %s670
              $region115: #{categorical_mlp_policy_forward.1} parent=108 // loop_footer_branch
                %669 = sbr.rel target = $region111
              $region116: #{categorical_mlp_policy_forward.1} parent=108 // loop_exit
                _
            $region109: #{categorical_mlp_policy_forward.1} parent=100 // pred_fallthru
              _
          $region101: #{categorical_mlp_policy_forward.1} parent=96 // pred_fallthru
            _
          %697 = vnop
        $region97: #{categorical_mlp_policy_forward.1} parent=88 // pred_fallthru
          _
      $region89: #{categorical_mlp_policy_forward.1} parent=5 // pred_fallthru
        _
      %p698 = scmp.le.s32.totalorder 2, %s14
      // Predicated region
      $region132: #{categorical_mlp_policy_forward.1} parent=5 // pred_check
        %p699 = pneg %p698
      $region133: #{categorical_mlp_policy_forward.1} parent=5 // pred_check_branch
        %701 = sbr.rel (%p699) target = $region135
      $region134: #{categorical_mlp_policy_forward.1} parent=5 // pred_region
        %s702 = ssub.s32 %s14, 2
        // Predicated region
        $region136: #{categorical_mlp_policy_forward.1} parent=134 // pred_check
          %p703 = pneg %p216
        $region137: #{categorical_mlp_policy_forward.1} parent=134 // pred_check_branch
          %705 = sbr.rel (%p703) target = $region139
        $region138: #{categorical_mlp_policy_forward.1} parent=134 // pred_region
          %s706 = sand.u32 %s201, 1
          %s707 = sand.u32 %s201, 1
          %s708 = smul.addr %s707, 16
          %s709 = scalar_lea.vmem [#allocation3], %s708
        $region139: #{categorical_mlp_policy_forward.1} parent=134 // pred_fallthru
          _
      $region135: #{categorical_mlp_policy_forward.1} parent=5 // pred_fallthru
        _
    $region6: #{categorical_mlp_policy_forward.1} parent=1 // loop_footer
      %s18 = sadd.s32 1, %s14
    $region7: #{categorical_mlp_policy_forward.1} parent=1 // loop_footer_branch
      %13 = sbr.rel target = $region3
    $region8: #{categorical_mlp_policy_forward.1} parent=1 // loop_exit
      _

</llo_original>
